<compile_context>
chip_gen: v6e
topology: v6e:2x2x1
jax: 0.10.0
libtpu: 0.0.40
codegen_flags: <defaults>
</compile_context>

<pallas_src>
import math
from functools import partial

import jax
import jax.numpy as jnp
from jax import lax
from jax.experimental import pallas as pl
from jax.experimental.pallas import tpu as pltpu


def _round_up(x, m):
    return ((x + m - 1) // m) * m


def _embed_kernel(ids_ref, emb_ref, out_ref, *, scale, tokens_per_block, group, vocab):
    """One grid step: gather `tokens_per_block` rows from the VMEM-resident table.

    ids_ref : SMEM (n_pad,) int32                      -- scalar-prefetched token ids
    emb_ref : VMEM (vocab, d_model)                    -- full table, resident across steps
    out_ref : VMEM (tokens_per_block // group, group*d_model) -- lane-dense output slab
    """
    n_rows = tokens_per_block // group
    base = pl.program_id(0) * tokens_per_block

    def body(r, carry):
        rows = []
        for g in range(group):  # static unroll over lane groups
            tok = ids_ref[base + r * group + g]
            # TODO(synk): PyTorch's nn.Embedding raises on out-of-range ids; here
            # we clamp instead (no exceptions inside a TPU kernel).
            tok = jnp.clip(tok, 0, vocab - 1)
            rows.append(emb_ref[pl.ds(tok, 1), :])
        packed = rows[0] if group == 1 else jnp.concatenate(rows, axis=1)
        out_ref[pl.ds(r, 1), :] = (packed.astype(jnp.float32) * scale).astype(
            out_ref.dtype
        )
        return carry

    lax.fori_loop(0, n_rows, body, 0, unroll=min(8, n_rows))


def embeddings_forward(x_ids, emb_table, *, block_tokens=512):
    """x_ids: int32 (batch, seq); emb_table: float (vocab, d_model).

    Returns (batch, seq, d_model) = emb_table[x_ids] * sqrt(d_model).
    """
    batch, seq = x_ids.shape
    vocab, d_model = emb_table.shape
    n_tokens = batch * seq
    scale = math.sqrt(d_model)

    # Lane-packing factor: pack G tokens per output row so the written row is
    # 128 lanes wide (only when d_model divides 128 evenly).
    if d_model < 128 and 128 % d_model == 0:
        group = 128 // d_model
    else:
        group = 1

    # Token block size: multiple of 8*group so the packed output block has a
    # sublane count that is a multiple of 8; capped so tiny inputs do not do
    # excessive padded work.
    row_group = 8 * group
    tb = int(min(block_tokens, _round_up(n_tokens, row_group)))
    tb = max(row_group, _round_up(tb, row_group))
    n_pad = _round_up(n_tokens, tb)

    flat_ids = x_ids.reshape(n_tokens).astype(jnp.int32)
    if n_pad != n_tokens:
        flat_ids = jnp.pad(flat_ids, (0, n_pad - n_tokens))

    grid = (n_pad // tb,)
    out_rows = n_pad // group
    block_rows = tb // group
    out_width = group * d_model

    itemsize = jnp.dtype(emb_table.dtype).itemsize
    table_bytes = vocab * d_model * itemsize
    out_block_bytes = block_rows * out_width * itemsize
    # Resident table + double-buffered output block + headroom; keep below the
    # 112 MiB cap (v7x's 64 MiB physical budget only matters for huge tables).
    vmem_limit = int(
        min(
            max(32 * 1024 * 1024, table_bytes + 4 * out_block_bytes + (1 << 20)),
            112 * 1024 * 1024,
        )
    )
    # TODO(synk): for vocabularies too large for VMEM (esp. v7x's 64 MiB), add
    # an HBM-gather path (memory_space=pl.ANY + deep-pipelined make_async_copy).

    grid_spec = pltpu.PrefetchScalarGridSpec(
        num_scalar_prefetch=1,
        grid=grid,
        in_specs=[
            # Whole table in VMEM; constant block index -> DMA'd once, resident.
            pl.BlockSpec((vocab, d_model), lambda b, ids: (0, 0)),
        ],
        out_specs=pl.BlockSpec((block_rows, out_width), lambda b, ids: (b, 0)),
    )

    kernel = pl.pallas_call(
        partial(
            _embed_kernel,
            scale=scale,
            tokens_per_block=tb,
            group=group,
            vocab=vocab,
        ),
        out_shape=jax.ShapeDtypeStruct((out_rows, out_width), emb_table.dtype),
        grid_spec=grid_spec,
        compiler_params=pltpu.CompilerParams(
            dimension_semantics=("parallel",),
            vmem_limit_bytes=vmem_limit,
        ),
    )

    out_packed = kernel(flat_ids, emb_table)
    # (n_pad // G, G*d_model) row-major has the same flat layout as
    # (n_pad, d_model) row-major, so this reshape is pure plumbing.
    out_flat = out_packed.reshape(n_pad, d_model)
    return out_flat[:n_tokens].reshape(batch, seq, d_model)


if __name__ == "__main__":
    key = jax.random.PRNGKey(0)
    k_emb, k_ids, k_emb2, k_ids2 = jax.random.split(key, 4)

    # Case 1: small d_model (32) -> exercises lane-dense packing (G = 4).
    d_model, vocab_size, batch, seq = 32, 11, 2, 8
    emb_table = jax.random.normal(k_emb, (vocab_size, d_model), dtype=jnp.float32)
    x_ids = jax.random.randint(k_ids, (batch, seq), 0, vocab_size, dtype=jnp.int32)

    ref = emb_table[x_ids] * math.sqrt(d_model)
    out = jax.block_until_ready(embeddings_forward(x_ids, emb_table))
    assert out.shape == (batch, seq, d_model)
    assert jnp.allclose(out, ref, atol=1e-6, rtol=1e-6)

    # Case 2: lane-dense d_model (128), small block_tokens -> multi-step grid.
    d_model2, vocab_size2 = 128, 16
    emb_table2 = jax.random.normal(k_emb2, (vocab_size2, d_model2), dtype=jnp.float32)
    x_ids2 = jax.random.randint(k_ids2, (batch, seq), 0, vocab_size2, dtype=jnp.int32)

    ref2 = emb_table2[x_ids2] * math.sqrt(d_model2)
    out2 = jax.block_until_ready(
        embeddings_forward(x_ids2, emb_table2, block_tokens=8)
    )
    assert out2.shape == (batch, seq, d_model2)
    assert jnp.allclose(out2, ref2, atol=1e-6, rtol=1e-6)

    print("KERNEL_OK")
</pallas_src>

<mosaic_0001>
module attributes {stable_mosaic.version = 11 : i64} {
  func.func @_embed_kernel(%arg0: i32, %arg1: memref<32xi32, #tpu.memory_space<smem>>, %arg2: memref<11x32xf32, #tpu.memory_space<vmem>>, %arg3: memref<8x128xf32, #tpu.memory_space<vmem>>) attributes {dimension_semantics = [#tpu.dimension_semantics<parallel>], iteration_bounds = array<i64: 1>, scalar_prefetch = 1 : i64, scratch_operands = 0 : i64, tpu.core_type = #tpu.core_type<tc>, window_params = [{pipeline_mode = #tpu.pipeline_mode<synchronous>, transform_indices = @transform_0, window_bounds = array<i64: 11, 32>}, {transform_indices = @transform_1, window_bounds = array<i64: 8, 128>}]} {
    %c32_i32 = arith.constant 32 : i32
    %0 = arith.muli %arg0, %c32_i32 : i32
    %c0_i32 = arith.constant 0 : i32
    %c4_i32 = arith.constant 4 : i32
    %1 = arith.muli %c0_i32, %c4_i32 : i32
    %2 = arith.addi %0, %1 : i32
    %c0_i32_0 = arith.constant 0 : i32
    %3 = arith.addi %2, %c0_i32_0 : i32
    %4 = arith.index_cast %3 : i32 to index
    %5 = memref.load %arg1[%4] : memref<32xi32, #tpu.memory_space<smem>>
    %c0_i32_1 = arith.constant 0 : i32
    %c10_i32 = arith.constant 10 : i32
    %6 = arith.maxsi %c0_i32_1, %5 : i32
    %7 = arith.minsi %c10_i32, %6 : i32
    %8 = arith.index_cast %7 : i32 to index
    %c0 = arith.constant 0 : index
    %9 = vector.load %arg2[%8, %c0] : memref<11x32xf32, #tpu.memory_space<vmem>>, vector<1x32xf32>
    %c4_i32_2 = arith.constant 4 : i32
    %10 = arith.muli %c0_i32, %c4_i32_2 : i32
    %11 = arith.addi %0, %10 : i32
    %c1_i32 = arith.constant 1 : i32
    %12 = arith.addi %11, %c1_i32 : i32
    %13 = arith.index_cast %12 : i32 to index
    %14 = memref.load %arg1[%13] : memref<32xi32, #tpu.memory_space<smem>>
    %c0_i32_3 = arith.constant 0 : i32
    %c10_i32_4 = arith.constant 10 : i32
    %15 = arith.maxsi %c0_i32_3, %14 : i32
    %16 = arith.minsi %c10_i32_4, %15 : i32
    %17 = arith.index_cast %16 : i32 to index
    %c0_5 = arith.constant 0 : index
    %18 = vector.load %arg2[%17, %c0_5] : memref<11x32xf32, #tpu.memory_space<vmem>>, vector<1x32xf32>
    %c4_i32_6 = arith.constant 4 : i32
    %19 = arith.muli %c0_i32, %c4_i32_6 : i32
    %20 = arith.addi %0, %19 : i32
    %c2_i32 = arith.constant 2 : i32
    %21 = arith.addi %20, %c2_i32 : i32
    %22 = arith.index_cast %21 : i32 to index
    %23 = memref.load %arg1[%22] : memref<32xi32, #tpu.memory_space<smem>>
    %c0_i32_7 = arith.constant 0 : i32
    %c10_i32_8 = arith.constant 10 : i32
    %24 = arith.maxsi %c0_i32_7, %23 : i32
    %25 = arith.minsi %c10_i32_8, %24 : i32
    %26 = arith.index_cast %25 : i32 to index
    %c0_9 = arith.constant 0 : index
    %27 = vector.load %arg2[%26, %c0_9] : memref<11x32xf32, #tpu.memory_space<vmem>>, vector<1x32xf32>
    %c4_i32_10 = arith.constant 4 : i32
    %28 = arith.muli %c0_i32, %c4_i32_10 : i32
    %29 = arith.addi %0, %28 : i32
    %c3_i32 = arith.constant 3 : i32
    %30 = arith.addi %29, %c3_i32 : i32
    %31 = arith.index_cast %30 : i32 to index
    %32 = memref.load %arg1[%31] : memref<32xi32, #tpu.memory_space<smem>>
    %c0_i32_11 = arith.constant 0 : i32
    %c10_i32_12 = arith.constant 10 : i32
    %33 = arith.maxsi %c0_i32_11, %32 : i32
    %34 = arith.minsi %c10_i32_12, %33 : i32
    %35 = arith.index_cast %34 : i32 to index
    %c0_13 = arith.constant 0 : index
    %36 = vector.load %arg2[%35, %c0_13] : memref<11x32xf32, #tpu.memory_space<vmem>>, vector<1x32xf32>
    %37 = tpu.concatenate %9, %18, %27, %36 in 1 : vector<1x32xf32>, vector<1x32xf32>, vector<1x32xf32>, vector<1x32xf32> -> vector<1x128xf32>
    %cst = arith.constant 5.65685415 : f32
    %38 = vector.broadcast %cst : f32 to vector<1x128xf32>
    %39 = arith.mulf %37, %38 : vector<1x128xf32>
    %40 = arith.index_cast %c0_i32 : i32 to index
    %c0_14 = arith.constant 0 : index
    %41 = vector.load %arg3[%40, %c0_14] : memref<8x128xf32, #tpu.memory_space<vmem>>, vector<1x128xf32>
    tpu.vector_store %arg3[%40, %c0_14], %39 {strides = array<i32>} : memref<8x128xf32, #tpu.memory_space<vmem>>, vector<1x128xf32>,
    %c1_i32_15 = arith.constant 1 : i32
    %c4_i32_16 = arith.constant 4 : i32
    %42 = arith.muli %c1_i32_15, %c4_i32_16 : i32
    %43 = arith.addi %0, %42 : i32
    %c0_i32_17 = arith.constant 0 : i32
    %44 = arith.addi %43, %c0_i32_17 : i32
    %45 = arith.index_cast %44 : i32 to index
    %46 = memref.load %arg1[%45] : memref<32xi32, #tpu.memory_space<smem>>
    %c0_i32_18 = arith.constant 0 : i32
    %c10_i32_19 = arith.constant 10 : i32
    %47 = arith.maxsi %c0_i32_18, %46 : i32
    %48 = arith.minsi %c10_i32_19, %47 : i32
    %49 = arith.index_cast %48 : i32 to index
    %c0_20 = arith.constant 0 : index
    %50 = vector.load %arg2[%49, %c0_20] : memref<11x32xf32, #tpu.memory_space<vmem>>, vector<1x32xf32>
    %c4_i32_21 = arith.constant 4 : i32
    %51 = arith.muli %c1_i32_15, %c4_i32_21 : i32
    %52 = arith.addi %0, %51 : i32
    %c1_i32_22 = arith.constant 1 : i32
    %53 = arith.addi %52, %c1_i32_22 : i32
    %54 = arith.index_cast %53 : i32 to index
    %55 = memref.load %arg1[%54] : memref<32xi32, #tpu.memory_space<smem>>
    %c0_i32_23 = arith.constant 0 : i32
    %c10_i32_24 = arith.constant 10 : i32
    %56 = arith.maxsi %c0_i32_23, %55 : i32
    %57 = arith.minsi %c10_i32_24, %56 : i32
    %58 = arith.index_cast %57 : i32 to index
    %c0_25 = arith.constant 0 : index
    %59 = vector.load %arg2[%58, %c0_25] : memref<11x32xf32, #tpu.memory_space<vmem>>, vector<1x32xf32>
    %c4_i32_26 = arith.constant 4 : i32
    %60 = arith.muli %c1_i32_15, %c4_i32_26 : i32
    %61 = arith.addi %0, %60 : i32
    %c2_i32_27 = arith.constant 2 : i32
    %62 = arith.addi %61, %c2_i32_27 : i32
    %63 = arith.index_cast %62 : i32 to index
    %64 = memref.load %arg1[%63] : memref<32xi32, #tpu.memory_space<smem>>
    %c0_i32_28 = arith.constant 0 : i32
    %c10_i32_29 = arith.constant 10 : i32
    %65 = arith.maxsi %c0_i32_28, %64 : i32
    %66 = arith.minsi %c10_i32_29, %65 : i32
    %67 = arith.index_cast %66 : i32 to index
    %c0_30 = arith.constant 0 : index
    %68 = vector.load %arg2[%67, %c0_30] : memref<11x32xf32, #tpu.memory_space<vmem>>, vector<1x32xf32>
    %c4_i32_31 = arith.constant 4 : i32
    %69 = arith.muli %c1_i32_15, %c4_i32_31 : i32
    %70 = arith.addi %0, %69 : i32
    %c3_i32_32 = arith.constant 3 : i32
    %71 = arith.addi %70, %c3_i32_32 : i32
    %72 = arith.index_cast %71 : i32 to index
    %73 = memref.load %arg1[%72] : memref<32xi32, #tpu.memory_space<smem>>
    %c0_i32_33 = arith.constant 0 : i32
    %c10_i32_34 = arith.constant 10 : i32
    %74 = arith.maxsi %c0_i32_33, %73 : i32
    %75 = arith.minsi %c10_i32_34, %74 : i32
    %76 = arith.index_cast %75 : i32 to index
    %c0_35 = arith.constant 0 : index
    %77 = vector.load %arg2[%76, %c0_35] : memref<11x32xf32, #tpu.memory_space<vmem>>, vector<1x32xf32>
    %78 = tpu.concatenate %50, %59, %68, %77 in 1 : vector<1x32xf32>, vector<1x32xf32>, vector<1x32xf32>, vector<1x32xf32> -> vector<1x128xf32>
    %cst_36 = arith.constant 5.65685415 : f32
    %79 = vector.broadcast %cst_36 : f32 to vector<1x128xf32>
    %80 = arith.mulf %78, %79 : vector<1x128xf32>
    %81 = arith.index_cast %c1_i32_15 : i32 to index
    %c0_37 = arith.constant 0 : index
    %82 = vector.load %arg3[%81, %c0_37] : memref<8x128xf32, #tpu.memory_space<vmem>>, vector<1x128xf32>
    tpu.vector_store %arg3[%81, %c0_37], %80 {strides = array<i32>} : memref<8x128xf32, #tpu.memory_space<vmem>>, vector<1x128xf32>,
    %c2_i32_38 = arith.constant 2 : i32
    %c4_i32_39 = arith.constant 4 : i32
    %83 = arith.muli %c2_i32_38, %c4_i32_39 : i32
    %84 = arith.addi %0, %83 : i32
    %c0_i32_40 = arith.constant 0 : i32
    %85 = arith.addi %84, %c0_i32_40 : i32
    %86 = arith.index_cast %85 : i32 to index
    %87 = memref.load %arg1[%86] : memref<32xi32, #tpu.memory_space<smem>>
    %c0_i32_41 = arith.constant 0 : i32
    %c10_i32_42 = arith.constant 10 : i32
    %88 = arith.maxsi %c0_i32_41, %87 : i32
    %89 = arith.minsi %c10_i32_42, %88 : i32
    %90 = arith.index_cast %89 : i32 to index
    %c0_43 = arith.constant 0 : index
    %91 = vector.load %arg2[%90, %c0_43] : memref<11x32xf32, #tpu.memory_space<vmem>>, vector<1x32xf32>
    %c4_i32_44 = arith.constant 4 : i32
    %92 = arith.muli %c2_i32_38, %c4_i32_44 : i32
    %93 = arith.addi %0, %92 : i32
    %c1_i32_45 = arith.constant 1 : i32
    %94 = arith.addi %93, %c1_i32_45 : i32
    %95 = arith.index_cast %94 : i32 to index
    %96 = memref.load %arg1[%95] : memref<32xi32, #tpu.memory_space<smem>>
    %c0_i32_46 = arith.constant 0 : i32
    %c10_i32_47 = arith.constant 10 : i32
    %97 = arith.maxsi %c0_i32_46, %96 : i32
    %98 = arith.minsi %c10_i32_47, %97 : i32
    %99 = arith.index_cast %98 : i32 to index
    %c0_48 = arith.constant 0 : index
    %100 = vector.load %arg2[%99, %c0_48] : memref<11x32xf32, #tpu.memory_space<vmem>>, vector<1x32xf32>
    %c4_i32_49 = arith.constant 4 : i32
    %101 = arith.muli %c2_i32_38, %c4_i32_49 : i32
    %102 = arith.addi %0, %101 : i32
    %c2_i32_50 = arith.constant 2 : i32
    %103 = arith.addi %102, %c2_i32_50 : i32
    %104 = arith.index_cast %103 : i32 to index
    %105 = memref.load %arg1[%104] : memref<32xi32, #tpu.memory_space<smem>>
    %c0_i32_51 = arith.constant 0 : i32
    %c10_i32_52 = arith.constant 10 : i32
    %106 = arith.maxsi %c0_i32_51, %105 : i32
    %107 = arith.minsi %c10_i32_52, %106 : i32
    %108 = arith.index_cast %107 : i32 to index
    %c0_53 = arith.constant 0 : index
    %109 = vector.load %arg2[%108, %c0_53] : memref<11x32xf32, #tpu.memory_space<vmem>>, vector<1x32xf32>
    %c4_i32_54 = arith.constant 4 : i32
    %110 = arith.muli %c2_i32_38, %c4_i32_54 : i32
    %111 = arith.addi %0, %110 : i32
    %c3_i32_55 = arith.constant 3 : i32
    %112 = arith.addi %111, %c3_i32_55 : i32
    %113 = arith.index_cast %112 : i32 to index
    %114 = memref.load %arg1[%113] : memref<32xi32, #tpu.memory_space<smem>>
    %c0_i32_56 = arith.constant 0 : i32
    %c10_i32_57 = arith.constant 10 : i32
    %115 = arith.maxsi %c0_i32_56, %114 : i32
    %116 = arith.minsi %c10_i32_57, %115 : i32
    %117 = arith.index_cast %116 : i32 to index
    %c0_58 = arith.constant 0 : index
    %118 = vector.load %arg2[%117, %c0_58] : memref<11x32xf32, #tpu.memory_space<vmem>>, vector<1x32xf32>
    %119 = tpu.concatenate %91, %100, %109, %118 in 1 : vector<1x32xf32>, vector<1x32xf32>, vector<1x32xf32>, vector<1x32xf32> -> vector<1x128xf32>
    %cst_59 = arith.constant 5.65685415 : f32
    %120 = vector.broadcast %cst_59 : f32 to vector<1x128xf32>
    %121 = arith.mulf %119, %120 : vector<1x128xf32>
    %122 = arith.index_cast %c2_i32_38 : i32 to index
    %c0_60 = arith.constant 0 : index
    %123 = vector.load %arg3[%122, %c0_60] : memref<8x128xf32, #tpu.memory_space<vmem>>, vector<1x128xf32>
    tpu.vector_store %arg3[%122, %c0_60], %121 {strides = array<i32>} : memref<8x128xf32, #tpu.memory_space<vmem>>, vector<1x128xf32>,
    %c3_i32_61 = arith.constant 3 : i32
    %c4_i32_62 = arith.constant 4 : i32
    %124 = arith.muli %c3_i32_61, %c4_i32_62 : i32
    %125 = arith.addi %0, %124 : i32
    %c0_i32_63 = arith.constant 0 : i32
    %126 = arith.addi %125, %c0_i32_63 : i32
    %127 = arith.index_cast %126 : i32 to index
    %128 = memref.load %arg1[%127] : memref<32xi32, #tpu.memory_space<smem>>
    %c0_i32_64 = arith.constant 0 : i32
    %c10_i32_65 = arith.constant 10 : i32
    %129 = arith.maxsi %c0_i32_64, %128 : i32
    %130 = arith.minsi %c10_i32_65, %129 : i32
    %131 = arith.index_cast %130 : i32 to index
    %c0_66 = arith.constant 0 : index
    %132 = vector.load %arg2[%131, %c0_66] : memref<11x32xf32, #tpu.memory_space<vmem>>, vector<1x32xf32>
    %c4_i32_67 = arith.constant 4 : i32
    %133 = arith.muli %c3_i32_61, %c4_i32_67 : i32
    %134 = arith.addi %0, %133 : i32
    %c1_i32_68 = arith.constant 1 : i32
    %135 = arith.addi %134, %c1_i32_68 : i32
    %136 = arith.index_cast %135 : i32 to index
    %137 = memref.load %arg1[%136] : memref<32xi32, #tpu.memory_space<smem>>
    %c0_i32_69 = arith.constant 0 : i32
    %c10_i32_70 = arith.constant 10 : i32
    %138 = arith.maxsi %c0_i32_69, %137 : i32
    %139 = arith.minsi %c10_i32_70, %138 : i32
    %140 = arith.index_cast %139 : i32 to index
    %c0_71 = arith.constant 0 : index
    %141 = vector.load %arg2[%140, %c0_71] : memref<11x32xf32, #tpu.memory_space<vmem>>, vector<1x32xf32>
    %c4_i32_72 = arith.constant 4 : i32
    %142 = arith.muli %c3_i32_61, %c4_i32_72 : i32
    %143 = arith.addi %0, %142 : i32
    %c2_i32_73 = arith.constant 2 : i32
    %144 = arith.addi %143, %c2_i32_73 : i32
    %145 = arith.index_cast %144 : i32 to index
    %146 = memref.load %arg1[%145] : memref<32xi32, #tpu.memory_space<smem>>
    %c0_i32_74 = arith.constant 0 : i32
    %c10_i32_75 = arith.constant 10 : i32
    %147 = arith.maxsi %c0_i32_74, %146 : i32
    %148 = arith.minsi %c10_i32_75, %147 : i32
    %149 = arith.index_cast %148 : i32 to index
    %c0_76 = arith.constant 0 : index
    %150 = vector.load %arg2[%149, %c0_76] : memref<11x32xf32, #tpu.memory_space<vmem>>, vector<1x32xf32>
    %c4_i32_77 = arith.constant 4 : i32
    %151 = arith.muli %c3_i32_61, %c4_i32_77 : i32
    %152 = arith.addi %0, %151 : i32
    %c3_i32_78 = arith.constant 3 : i32
    %153 = arith.addi %152, %c3_i32_78 : i32
    %154 = arith.index_cast %153 : i32 to index
    %155 = memref.load %arg1[%154] : memref<32xi32, #tpu.memory_space<smem>>
    %c0_i32_79 = arith.constant 0 : i32
    %c10_i32_80 = arith.constant 10 : i32
    %156 = arith.maxsi %c0_i32_79, %155 : i32
    %157 = arith.minsi %c10_i32_80, %156 : i32
    %158 = arith.index_cast %157 : i32 to index
    %c0_81 = arith.constant 0 : index
    %159 = vector.load %arg2[%158, %c0_81] : memref<11x32xf32, #tpu.memory_space<vmem>>, vector<1x32xf32>
    %160 = tpu.concatenate %132, %141, %150, %159 in 1 : vector<1x32xf32>, vector<1x32xf32>, vector<1x32xf32>, vector<1x32xf32> -> vector<1x128xf32>
    %cst_82 = arith.constant 5.65685415 : f32
    %161 = vector.broadcast %cst_82 : f32 to vector<1x128xf32>
    %162 = arith.mulf %160, %161 : vector<1x128xf32>
    %163 = arith.index_cast %c3_i32_61 : i32 to index
    %c0_83 = arith.constant 0 : index
    %164 = vector.load %arg3[%163, %c0_83] : memref<8x128xf32, #tpu.memory_space<vmem>>, vector<1x128xf32>
    tpu.vector_store %arg3[%163, %c0_83], %162 {strides = array<i32>} : memref<8x128xf32, #tpu.memory_space<vmem>>, vector<1x128xf32>,
    %c4_i32_84 = arith.constant 4 : i32
    %c4_i32_85 = arith.constant 4 : i32
    %165 = arith.muli %c4_i32_84, %c4_i32_85 : i32
    %166 = arith.addi %0, %165 : i32
    %c0_i32_86 = arith.constant 0 : i32
    %167 = arith.addi %166, %c0_i32_86 : i32
    %168 = arith.index_cast %167 : i32 to index
    %169 = memref.load %arg1[%168] : memref<32xi32, #tpu.memory_space<smem>>
    %c0_i32_87 = arith.constant 0 : i32
    %c10_i32_88 = arith.constant 10 : i32
    %170 = arith.maxsi %c0_i32_87, %169 : i32
    %171 = arith.minsi %c10_i32_88, %170 : i32
    %172 = arith.index_cast %171 : i32 to index
    %c0_89 = arith.constant 0 : index
    %173 = vector.load %arg2[%172, %c0_89] : memref<11x32xf32, #tpu.memory_space<vmem>>, vector<1x32xf32>
    %c4_i32_90 = arith.constant 4 : i32
    %174 = arith.muli %c4_i32_84, %c4_i32_90 : i32
    %175 = arith.addi %0, %174 : i32
    %c1_i32_91 = arith.constant 1 : i32
    %176 = arith.addi %175, %c1_i32_91 : i32
    %177 = arith.index_cast %176 : i32 to index
    %178 = memref.load %arg1[%177] : memref<32xi32, #tpu.memory_space<smem>>
    %c0_i32_92 = arith.constant 0 : i32
    %c10_i32_93 = arith.constant 10 : i32
    %179 = arith.maxsi %c0_i32_92, %178 : i32
    %180 = arith.minsi %c10_i32_93, %179 : i32
    %181 = arith.index_cast %180 : i32 to index
    %c0_94 = arith.constant 0 : index
    %182 = vector.load %arg2[%181, %c0_94] : memref<11x32xf32, #tpu.memory_space<vmem>>, vector<1x32xf32>
    %c4_i32_95 = arith.constant 4 : i32
    %183 = arith.muli %c4_i32_84, %c4_i32_95 : i32
    %184 = arith.addi %0, %183 : i32
    %c2_i32_96 = arith.constant 2 : i32
    %185 = arith.addi %184, %c2_i32_96 : i32
    %186 = arith.index_cast %185 : i32 to index
    %187 = memref.load %arg1[%186] : memref<32xi32, #tpu.memory_space<smem>>
    %c0_i32_97 = arith.constant 0 : i32
    %c10_i32_98 = arith.constant 10 : i32
    %188 = arith.maxsi %c0_i32_97, %187 : i32
    %189 = arith.minsi %c10_i32_98, %188 : i32
    %190 = arith.index_cast %189 : i32 to index
    %c0_99 = arith.constant 0 : index
    %191 = vector.load %arg2[%190, %c0_99] : memref<11x32xf32, #tpu.memory_space<vmem>>, vector<1x32xf32>
    %c4_i32_100 = arith.constant 4 : i32
    %192 = arith.muli %c4_i32_84, %c4_i32_100 : i32
    %193 = arith.addi %0, %192 : i32
    %c3_i32_101 = arith.constant 3 : i32
    %194 = arith.addi %193, %c3_i32_101 : i32
    %195 = arith.index_cast %194 : i32 to index
    %196 = memref.load %arg1[%195] : memref<32xi32, #tpu.memory_space<smem>>
    %c0_i32_102 = arith.constant 0 : i32
    %c10_i32_103 = arith.constant 10 : i32
    %197 = arith.maxsi %c0_i32_102, %196 : i32
    %198 = arith.minsi %c10_i32_103, %197 : i32
    %199 = arith.index_cast %198 : i32 to index
    %c0_104 = arith.constant 0 : index
    %200 = vector.load %arg2[%199, %c0_104] : memref<11x32xf32, #tpu.memory_space<vmem>>, vector<1x32xf32>
    %201 = tpu.concatenate %173, %182, %191, %200 in 1 : vector<1x32xf32>, vector<1x32xf32>, vector<1x32xf32>, vector<1x32xf32> -> vector<1x128xf32>
    %cst_105 = arith.constant 5.65685415 : f32
    %202 = vector.broadcast %cst_105 : f32 to vector<1x128xf32>
    %203 = arith.mulf %201, %202 : vector<1x128xf32>
    %204 = arith.index_cast %c4_i32_84 : i32 to index
    %c0_106 = arith.constant 0 : index
    %205 = vector.load %arg3[%204, %c0_106] : memref<8x128xf32, #tpu.memory_space<vmem>>, vector<1x128xf32>
    tpu.vector_store %arg3[%204, %c0_106], %203 {strides = array<i32>} : memref<8x128xf32, #tpu.memory_space<vmem>>, vector<1x128xf32>,
    %c5_i32 = arith.constant 5 : i32
    %c4_i32_107 = arith.constant 4 : i32
    %206 = arith.muli %c5_i32, %c4_i32_107 : i32
    %207 = arith.addi %0, %206 : i32
    %c0_i32_108 = arith.constant 0 : i32
    %208 = arith.addi %207, %c0_i32_108 : i32
    %209 = arith.index_cast %208 : i32 to index
    %210 = memref.load %arg1[%209] : memref<32xi32, #tpu.memory_space<smem>>
    %c0_i32_109 = arith.constant 0 : i32
    %c10_i32_110 = arith.constant 10 : i32
    %211 = arith.maxsi %c0_i32_109, %210 : i32
    %212 = arith.minsi %c10_i32_110, %211 : i32
    %213 = arith.index_cast %212 : i32 to index
    %c0_111 = arith.constant 0 : index
    %214 = vector.load %arg2[%213, %c0_111] : memref<11x32xf32, #tpu.memory_space<vmem>>, vector<1x32xf32>
    %c4_i32_112 = arith.constant 4 : i32
    %215 = arith.muli %c5_i32, %c4_i32_112 : i32
    %216 = arith.addi %0, %215 : i32
    %c1_i32_113 = arith.constant 1 : i32
    %217 = arith.addi %216, %c1_i32_113 : i32
    %218 = arith.index_cast %217 : i32 to index
    %219 = memref.load %arg1[%218] : memref<32xi32, #tpu.memory_space<smem>>
    %c0_i32_114 = arith.constant 0 : i32
    %c10_i32_115 = arith.constant 10 : i32
    %220 = arith.maxsi %c0_i32_114, %219 : i32
    %221 = arith.minsi %c10_i32_115, %220 : i32
    %222 = arith.index_cast %221 : i32 to index
    %c0_116 = arith.constant 0 : index
    %223 = vector.load %arg2[%222, %c0_116] : memref<11x32xf32, #tpu.memory_space<vmem>>, vector<1x32xf32>
    %c4_i32_117 = arith.constant 4 : i32
    %224 = arith.muli %c5_i32, %c4_i32_117 : i32
    %225 = arith.addi %0, %224 : i32
    %c2_i32_118 = arith.constant 2 : i32
    %226 = arith.addi %225, %c2_i32_118 : i32
    %227 = arith.index_cast %226 : i32 to index
    %228 = memref.load %arg1[%227] : memref<32xi32, #tpu.memory_space<smem>>
    %c0_i32_119 = arith.constant 0 : i32
    %c10_i32_120 = arith.constant 10 : i32
    %229 = arith.maxsi %c0_i32_119, %228 : i32
    %230 = arith.minsi %c10_i32_120, %229 : i32
    %231 = arith.index_cast %230 : i32 to index
    %c0_121 = arith.constant 0 : index
    %232 = vector.load %arg2[%231, %c0_121] : memref<11x32xf32, #tpu.memory_space<vmem>>, vector<1x32xf32>
    %c4_i32_122 = arith.constant 4 : i32
    %233 = arith.muli %c5_i32, %c4_i32_122 : i32
    %234 = arith.addi %0, %233 : i32
    %c3_i32_123 = arith.constant 3 : i32
    %235 = arith.addi %234, %c3_i32_123 : i32
    %236 = arith.index_cast %235 : i32 to index
    %237 = memref.load %arg1[%236] : memref<32xi32, #tpu.memory_space<smem>>
    %c0_i32_124 = arith.constant 0 : i32
    %c10_i32_125 = arith.constant 10 : i32
    %238 = arith.maxsi %c0_i32_124, %237 : i32
    %239 = arith.minsi %c10_i32_125, %238 : i32
    %240 = arith.index_cast %239 : i32 to index
    %c0_126 = arith.constant 0 : index
    %241 = vector.load %arg2[%240, %c0_126] : memref<11x32xf32, #tpu.memory_space<vmem>>, vector<1x32xf32>
    %242 = tpu.concatenate %214, %223, %232, %241 in 1 : vector<1x32xf32>, vector<1x32xf32>, vector<1x32xf32>, vector<1x32xf32> -> vector<1x128xf32>
    %cst_127 = arith.constant 5.65685415 : f32
    %243 = vector.broadcast %cst_127 : f32 to vector<1x128xf32>
    %244 = arith.mulf %242, %243 : vector<1x128xf32>
    %245 = arith.index_cast %c5_i32 : i32 to index
    %c0_128 = arith.constant 0 : index
    %246 = vector.load %arg3[%245, %c0_128] : memref<8x128xf32, #tpu.memory_space<vmem>>, vector<1x128xf32>
    tpu.vector_store %arg3[%245, %c0_128], %244 {strides = array<i32>} : memref<8x128xf32, #tpu.memory_space<vmem>>, vector<1x128xf32>,
    %c6_i32 = arith.constant 6 : i32
    %c4_i32_129 = arith.constant 4 : i32
    %247 = arith.muli %c6_i32, %c4_i32_129 : i32
    %248 = arith.addi %0, %247 : i32
    %c0_i32_130 = arith.constant 0 : i32
    %249 = arith.addi %248, %c0_i32_130 : i32
    %250 = arith.index_cast %249 : i32 to index
    %251 = memref.load %arg1[%250] : memref<32xi32, #tpu.memory_space<smem>>
    %c0_i32_131 = arith.constant 0 : i32
    %c10_i32_132 = arith.constant 10 : i32
    %252 = arith.maxsi %c0_i32_131, %251 : i32
    %253 = arith.minsi %c10_i32_132, %252 : i32
    %254 = arith.index_cast %253 : i32 to index
    %c0_133 = arith.constant 0 : index
    %255 = vector.load %arg2[%254, %c0_133] : memref<11x32xf32, #tpu.memory_space<vmem>>, vector<1x32xf32>
    %c4_i32_134 = arith.constant 4 : i32
    %256 = arith.muli %c6_i32, %c4_i32_134 : i32
    %257 = arith.addi %0, %256 : i32
    %c1_i32_135 = arith.constant 1 : i32
    %258 = arith.addi %257, %c1_i32_135 : i32
    %259 = arith.index_cast %258 : i32 to index
    %260 = memref.load %arg1[%259] : memref<32xi32, #tpu.memory_space<smem>>
    %c0_i32_136 = arith.constant 0 : i32
    %c10_i32_137 = arith.constant 10 : i32
    %261 = arith.maxsi %c0_i32_136, %260 : i32
    %262 = arith.minsi %c10_i32_137, %261 : i32
    %263 = arith.index_cast %262 : i32 to index
    %c0_138 = arith.constant 0 : index
    %264 = vector.load %arg2[%263, %c0_138] : memref<11x32xf32, #tpu.memory_space<vmem>>, vector<1x32xf32>
    %c4_i32_139 = arith.constant 4 : i32
    %265 = arith.muli %c6_i32, %c4_i32_139 : i32
    %266 = arith.addi %0, %265 : i32
    %c2_i32_140 = arith.constant 2 : i32
    %267 = arith.addi %266, %c2_i32_140 : i32
    %268 = arith.index_cast %267 : i32 to index
    %269 = memref.load %arg1[%268] : memref<32xi32, #tpu.memory_space<smem>>
    %c0_i32_141 = arith.constant 0 : i32
    %c10_i32_142 = arith.constant 10 : i32
    %270 = arith.maxsi %c0_i32_141, %269 : i32
    %271 = arith.minsi %c10_i32_142, %270 : i32
    %272 = arith.index_cast %271 : i32 to index
    %c0_143 = arith.constant 0 : index
    %273 = vector.load %arg2[%272, %c0_143] : memref<11x32xf32, #tpu.memory_space<vmem>>, vector<1x32xf32>
    %c4_i32_144 = arith.constant 4 : i32
    %274 = arith.muli %c6_i32, %c4_i32_144 : i32
    %275 = arith.addi %0, %274 : i32
    %c3_i32_145 = arith.constant 3 : i32
    %276 = arith.addi %275, %c3_i32_145 : i32
    %277 = arith.index_cast %276 : i32 to index
    %278 = memref.load %arg1[%277] : memref<32xi32, #tpu.memory_space<smem>>
    %c0_i32_146 = arith.constant 0 : i32
    %c10_i32_147 = arith.constant 10 : i32
    %279 = arith.maxsi %c0_i32_146, %278 : i32
    %280 = arith.minsi %c10_i32_147, %279 : i32
    %281 = arith.index_cast %280 : i32 to index
    %c0_148 = arith.constant 0 : index
    %282 = vector.load %arg2[%281, %c0_148] : memref<11x32xf32, #tpu.memory_space<vmem>>, vector<1x32xf32>
    %283 = tpu.concatenate %255, %264, %273, %282 in 1 : vector<1x32xf32>, vector<1x32xf32>, vector<1x32xf32>, vector<1x32xf32> -> vector<1x128xf32>
    %cst_149 = arith.constant 5.65685415 : f32
    %284 = vector.broadcast %cst_149 : f32 to vector<1x128xf32>
    %285 = arith.mulf %283, %284 : vector<1x128xf32>
    %286 = arith.index_cast %c6_i32 : i32 to index
    %c0_150 = arith.constant 0 : index
    %287 = vector.load %arg3[%286, %c0_150] : memref<8x128xf32, #tpu.memory_space<vmem>>, vector<1x128xf32>
    tpu.vector_store %arg3[%286, %c0_150], %285 {strides = array<i32>} : memref<8x128xf32, #tpu.memory_space<vmem>>, vector<1x128xf32>,
    %c7_i32 = arith.constant 7 : i32
    %c4_i32_151 = arith.constant 4 : i32
    %288 = arith.muli %c7_i32, %c4_i32_151 : i32
    %289 = arith.addi %0, %288 : i32
    %c0_i32_152 = arith.constant 0 : i32
    %290 = arith.addi %289, %c0_i32_152 : i32
    %291 = arith.index_cast %290 : i32 to index
    %292 = memref.load %arg1[%291] : memref<32xi32, #tpu.memory_space<smem>>
    %c0_i32_153 = arith.constant 0 : i32
    %c10_i32_154 = arith.constant 10 : i32
    %293 = arith.maxsi %c0_i32_153, %292 : i32
    %294 = arith.minsi %c10_i32_154, %293 : i32
    %295 = arith.index_cast %294 : i32 to index
    %c0_155 = arith.constant 0 : index
    %296 = vector.load %arg2[%295, %c0_155] : memref<11x32xf32, #tpu.memory_space<vmem>>, vector<1x32xf32>
    %c4_i32_156 = arith.constant 4 : i32
    %297 = arith.muli %c7_i32, %c4_i32_156 : i32
    %298 = arith.addi %0, %297 : i32
    %c1_i32_157 = arith.constant 1 : i32
    %299 = arith.addi %298, %c1_i32_157 : i32
    %300 = arith.index_cast %299 : i32 to index
    %301 = memref.load %arg1[%300] : memref<32xi32, #tpu.memory_space<smem>>
    %c0_i32_158 = arith.constant 0 : i32
    %c10_i32_159 = arith.constant 10 : i32
    %302 = arith.maxsi %c0_i32_158, %301 : i32
    %303 = arith.minsi %c10_i32_159, %302 : i32
    %304 = arith.index_cast %303 : i32 to index
    %c0_160 = arith.constant 0 : index
    %305 = vector.load %arg2[%304, %c0_160] : memref<11x32xf32, #tpu.memory_space<vmem>>, vector<1x32xf32>
    %c4_i32_161 = arith.constant 4 : i32
    %306 = arith.muli %c7_i32, %c4_i32_161 : i32
    %307 = arith.addi %0, %306 : i32
    %c2_i32_162 = arith.constant 2 : i32
    %308 = arith.addi %307, %c2_i32_162 : i32
    %309 = arith.index_cast %308 : i32 to index
    %310 = memref.load %arg1[%309] : memref<32xi32, #tpu.memory_space<smem>>
    %c0_i32_163 = arith.constant 0 : i32
    %c10_i32_164 = arith.constant 10 : i32
    %311 = arith.maxsi %c0_i32_163, %310 : i32
    %312 = arith.minsi %c10_i32_164, %311 : i32
    %313 = arith.index_cast %312 : i32 to index
    %c0_165 = arith.constant 0 : index
    %314 = vector.load %arg2[%313, %c0_165] : memref<11x32xf32, #tpu.memory_space<vmem>>, vector<1x32xf32>
    %c4_i32_166 = arith.constant 4 : i32
    %315 = arith.muli %c7_i32, %c4_i32_166 : i32
    %316 = arith.addi %0, %315 : i32
    %c3_i32_167 = arith.constant 3 : i32
    %317 = arith.addi %316, %c3_i32_167 : i32
    %318 = arith.index_cast %317 : i32 to index
    %319 = memref.load %arg1[%318] : memref<32xi32, #tpu.memory_space<smem>>
    %c0_i32_168 = arith.constant 0 : i32
    %c10_i32_169 = arith.constant 10 : i32
    %320 = arith.maxsi %c0_i32_168, %319 : i32
    %321 = arith.minsi %c10_i32_169, %320 : i32
    %322 = arith.index_cast %321 : i32 to index
    %c0_170 = arith.constant 0 : index
    %323 = vector.load %arg2[%322, %c0_170] : memref<11x32xf32, #tpu.memory_space<vmem>>, vector<1x32xf32>
    %324 = tpu.concatenate %296, %305, %314, %323 in 1 : vector<1x32xf32>, vector<1x32xf32>, vector<1x32xf32>, vector<1x32xf32> -> vector<1x128xf32>
    %cst_171 = arith.constant 5.65685415 : f32
    %325 = vector.broadcast %cst_171 : f32 to vector<1x128xf32>
    %326 = arith.mulf %324, %325 : vector<1x128xf32>
    %327 = arith.index_cast %c7_i32 : i32 to index
    %c0_172 = arith.constant 0 : index
    %328 = vector.load %arg3[%327, %c0_172] : memref<8x128xf32, #tpu.memory_space<vmem>>, vector<1x128xf32>
    tpu.vector_store %arg3[%327, %c0_172], %326 {strides = array<i32>} : memref<8x128xf32, #tpu.memory_space<vmem>>, vector<1x128xf32>,
    %c8_i32 = arith.constant 8 : i32
    return
  }
  func.func @transform_0(%arg0: i32, %arg1: memref<32xi32, #tpu.memory_space<smem>>) -> (i32, i32) {
    %c0_i32 = arith.constant 0 : i32
    %c0_i32_0 = arith.constant 0 : i32
    %c0_i32_1 = arith.constant 0 : i32
    return %c0_i32, %c0_i32_0 : i32, i32
  }
  func.func @transform_1(%arg0: i32, %arg1: memref<32xi32, #tpu.memory_space<smem>>) -> (i32, i32) {
    %c0_i32 = arith.constant 0 : i32
    %c0_i32_0 = arith.constant 0 : i32
    return %arg0, %c0_i32 : i32, i32
  }
}

</mosaic_0001>

<llo_original>
// kernel: tpu_custom_call.1
$region0: #{tpu_custom_call.1}
  #allocation0 [shape = 'u32[]', space=smem, size = 0x4, offset = 0x4, fixed_abs, tag = 'smem constant byte address 0x4 - core index']
  #allocation1 [shape = 'u32[144,128]{1,0:T(1,128)}', space=vmem, size = 0x12000, scoped, tag = 'internal scratch']
  #allocation2 [shape = 's32[1]{0}', space=sflag, size = 0x4, scoped, tag = 'scoped memory for tpu_custom_call.1']
  #allocation3 [shape = 'u8[512]{0}', space=smem, size = 0x200, scoped, tag = 'prefetched SMEM operand 0']
  %s0 = inlined_call_operand.hbm [shape: s32[32], index: 0, kind: input, shape index: {}]
  %s1 = inlined_call_operand.hbm [shape: f32[11,32], index: 1, kind: input, shape index: {}]
  %s2 = inlined_call_operand.hbm [shape: f32[8,128], index: 2, kind: output, shape index: {}]
  %s3 = sld [smem:[#allocation0]]
  $region18: #{tpu_custom_call.1} parent=0
    _
  %s5 = ssub.s32 1, %s3
  %s6 = scalar_select 0, %s5, %s3
  %8 = dma.hbm_to_smem %s0, 16, [#allocation3], [#allocation2]
  %9 = dma.done [#allocation2], 16
  %10 = sfence
  $region1: #{tpu_custom_call.1} parent=0
    #allocation4 [shape = 'u8[8192]{0}', space=vmem, size = 0x2000, scoped, tag = 'input window, operand 1, single buffered']
    #allocation5 [shape = 's32[1]{0}', space=sflag, size = 0x4, scoped, tag = 'scoped memory for tpu_custom_call.1']
    #allocation6 [shape = 's32[1]{0}', space=sflag, size = 0x4, scoped, tag = 'scoped memory for tpu_custom_call.1']
    #allocation7 [shape = 'u8[4096]{0}', space=vmem, size = 0x1000, scoped, tag = 'output window, operand 0, single buffered']
    %11 = vsyncpa [#allocation5], 0
    %12 = vsyncpa [#allocation6], 0
    // Predicated region
    $region2: #{tpu_custom_call.1} parent=1 // pred_check
      _
    $region3: #{tpu_custom_call.1} parent=1 // pred_check_branch
      %14 = sbr.rel (0) target = $region5
    $region4: #{tpu_custom_call.1} parent=1 // pred_region
      %s16 = ssub.s32 256, 256
      %17 = vsyncadd [#allocation5], %s16
      %s18 = sshll.u32 [#allocation4], 4
      %s19 = int_to_ptr.vmem [resolvable:$true] %s18
      %24 = dma.hbm_to_vmem [thread:$0]  %s1, 256, %s19, [#allocation5], 128, 128, 8
    $region5: #{tpu_custom_call.1} parent=1 // pred_fallthru
      _
    // Predicated region
    $region6: #{tpu_custom_call.1} parent=1 // pred_check
      _
    $region7: #{tpu_custom_call.1} parent=1 // pred_check_branch
      %26 = sbr.rel (0) target = $region9
    $region8: #{tpu_custom_call.1} parent=1 // pred_region
      %27 = dma.done [#allocation5], 256
    $region9: #{tpu_custom_call.1} parent=1 // pred_fallthru
      _
    %s28 = smul.u32 0, 32
    %s29 = sld [smem:[#allocation3 + %s28]]
    %p30 = scmp.gt.s32.totalorder %s29, 0
    %s31 = scalar_select %p30, %s29, 0
    %p32 = scmp.lt.s32.totalorder %s31, 10
    %s33 = scalar_select %p32, %s31, 10
    %s34 = scalar_lea.vmem [#allocation4], %s33
    %v35 = vld [vmem:[%s34] sm:$0x1]
    %s36 = sadd.s32 %s28, 1
    %s37 = sld [smem:[#allocation3 + %s36]]
    %p38 = scmp.gt.s32.totalorder %s37, 0
    %s39 = scalar_select %p38, %s37, 0
    %p40 = scmp.lt.s32.totalorder %s39, 10
    %s41 = scalar_select %p40, %s39, 10
    %s42 = scalar_lea.vmem [#allocation4], %s41
    %v43 = vld [vmem:[%s42] sm:$0x1]
    %s44 = sadd.s32 %s28, 2
    %s45 = sld [smem:[#allocation3 + %s44]]
    %p46 = scmp.gt.s32.totalorder %s45, 0
    %s47 = scalar_select %p46, %s45, 0
    %p48 = scmp.lt.s32.totalorder %s47, 10
    %s49 = scalar_select %p48, %s47, 10
    %s50 = scalar_lea.vmem [#allocation4], %s49
    %v51 = vld [vmem:[%s50] sm:$0x1]
    %s52 = sadd.s32 %s28, 3
    %s53 = sld [smem:[#allocation3 + %s52]]
    %p54 = scmp.gt.s32.totalorder %s53, 0
    %s55 = scalar_select %p54, %s53, 0
    %p56 = scmp.lt.s32.totalorder %s55, 10
    %s57 = scalar_select %p56, %s55, 10
    %s58 = scalar_lea.vmem [#allocation4], %s57
    %v59 = vld [vmem:[%s58] sm:$0x1]
    %61 = vrot.lane.b32.xlu0 %v43, 32
    %v62 = vpop.permute.xlu0 %61
    %65 = vrot.lane.b32.xlu0 %v51, 64
    %v66 = vpop.permute.xlu0 %65
    %69 = vrot.lane.b32.xlu0 %v59, 96
    %v70 = vpop.permute.xlu0 %69
    %vm72 = vcmask 261120
    %v73 = vsel %vm72, %v35, %v62
    %vm74 = vcmask 523264
    %v75 = vsel %vm74, %v73, %v66
    %vm76 = vcmask 785408
    %v77 = vsel %vm76, %v75, %v70
    %v78 = vmul.f32 %v77, 5.656854
    %79 = vst [vmem:[#allocation7] sm:$0x1] %v78
    %s80 = sadd.s32 %s28, 4
    %s81 = sld [smem:[#allocation3 + %s80]]
    %p82 = scmp.gt.s32.totalorder %s81, 0
    %s83 = scalar_select %p82, %s81, 0
    %p84 = scmp.lt.s32.totalorder %s83, 10
    %s85 = scalar_select %p84, %s83, 10
    %s86 = scalar_lea.vmem [#allocation4], %s85
    %v87 = vld [vmem:[%s86] sm:$0x1]
    %s88 = sadd.s32 %s28, 5
    %s89 = sld [smem:[#allocation3 + %s88]]
    %p90 = scmp.gt.s32.totalorder %s89, 0
    %s91 = scalar_select %p90, %s89, 0
    %p92 = scmp.lt.s32.totalorder %s91, 10
    %s93 = scalar_select %p92, %s91, 10
    %s94 = scalar_lea.vmem [#allocation4], %s93
    %v95 = vld [vmem:[%s94] sm:$0x1]
    %s96 = sadd.s32 %s28, 6
    %s97 = sld [smem:[#allocation3 + %s96]]
    %p98 = scmp.gt.s32.totalorder %s97, 0
    %s99 = scalar_select %p98, %s97, 0
    %p100 = scmp.lt.s32.totalorder %s99, 10
    %s101 = scalar_select %p100, %s99, 10
    %s102 = scalar_lea.vmem [#allocation4], %s101
    %v103 = vld [vmem:[%s102] sm:$0x1]
    %s104 = sadd.s32 %s28, 7
    %s105 = sld [smem:[#allocation3 + %s104]]
    %p106 = scmp.gt.s32.totalorder %s105, 0
    %s107 = scalar_select %p106, %s105, 0
    %p108 = scmp.lt.s32.totalorder %s107, 10
    %s109 = scalar_select %p108, %s107, 10
    %s110 = scalar_lea.vmem [#allocation4], %s109
    %v111 = vld [vmem:[%s110] sm:$0x1]
    %113 = vrot.lane.b32.xlu0 %v95, 32
    %v114 = vpop.permute.xlu0 %113
    %117 = vrot.lane.b32.xlu0 %v103, 64
    %v118 = vpop.permute.xlu0 %117
    %121 = vrot.lane.b32.xlu0 %v111, 96
    %v122 = vpop.permute.xlu0 %121
    %v124 = vsel %vm72, %v87, %v114
    %v125 = vsel %vm74, %v124, %v118
    %v126 = vsel %vm76, %v125, %v122
    %v127 = vmul.f32 %v126, 5.656854
    %128 = vst [vmem:[#allocation7 + $0x1] sm:$0x1] %v127
    %s129 = sadd.s32 %s28, 8
    %s130 = sld [smem:[#allocation3 + %s129]]
    %p131 = scmp.gt.s32.totalorder %s130, 0
    %s132 = scalar_select %p131, %s130, 0
    %p133 = scmp.lt.s32.totalorder %s132, 10
    %s134 = scalar_select %p133, %s132, 10
    %s135 = scalar_lea.vmem [#allocation4], %s134
    %v136 = vld [vmem:[%s135] sm:$0x1]
    %s137 = sadd.s32 %s28, 9
    %s138 = sld [smem:[#allocation3 + %s137]]
    %p139 = scmp.gt.s32.totalorder %s138, 0
    %s140 = scalar_select %p139, %s138, 0
    %p141 = scmp.lt.s32.totalorder %s140, 10
    %s142 = scalar_select %p141, %s140, 10
    %s143 = scalar_lea.vmem [#allocation4], %s142
    %v144 = vld [vmem:[%s143] sm:$0x1]
    %s145 = sadd.s32 %s28, 10
    %s146 = sld [smem:[#allocation3 + %s145]]
    %p147 = scmp.gt.s32.totalorder %s146, 0
    %s148 = scalar_select %p147, %s146, 0
    %p149 = scmp.lt.s32.totalorder %s148, 10
    %s150 = scalar_select %p149, %s148, 10
    %s151 = scalar_lea.vmem [#allocation4], %s150
    %v152 = vld [vmem:[%s151] sm:$0x1]
    %s153 = sadd.s32 %s28, 11
    %s154 = sld [smem:[#allocation3 + %s153]]
    %p155 = scmp.gt.s32.totalorder %s154, 0
    %s156 = scalar_select %p155, %s154, 0
    %p157 = scmp.lt.s32.totalorder %s156, 10
    %s158 = scalar_select %p157, %s156, 10
    %s159 = scalar_lea.vmem [#allocation4], %s158
    %v160 = vld [vmem:[%s159] sm:$0x1]
    %162 = vrot.lane.b32.xlu0 %v144, 32
    %v163 = vpop.permute.xlu0 %162
    %166 = vrot.lane.b32.xlu0 %v152, 64
    %v167 = vpop.permute.xlu0 %166
    %170 = vrot.lane.b32.xlu0 %v160, 96
    %v171 = vpop.permute.xlu0 %170
    %v173 = vsel %vm72, %v136, %v163
    %v174 = vsel %vm74, %v173, %v167
    %v175 = vsel %vm76, %v174, %v171
    %v176 = vmul.f32 %v175, 5.656854
    %177 = vst [vmem:[#allocation7 + $0x2] sm:$0x1] %v176
    %s178 = sadd.s32 %s28, 12
    %s179 = sld [smem:[#allocation3 + %s178]]
    %p180 = scmp.gt.s32.totalorder %s179, 0
    %s181 = scalar_select %p180, %s179, 0
    %p182 = scmp.lt.s32.totalorder %s181, 10
    %s183 = scalar_select %p182, %s181, 10
    %s184 = scalar_lea.vmem [#allocation4], %s183
    %v185 = vld [vmem:[%s184] sm:$0x1]
    %s186 = sadd.s32 %s28, 13
    %s187 = sld [smem:[#allocation3 + %s186]]
    %p188 = scmp.gt.s32.totalorder %s187, 0
    %s189 = scalar_select %p188, %s187, 0
    %p190 = scmp.lt.s32.totalorder %s189, 10
    %s191 = scalar_select %p190, %s189, 10
    %s192 = scalar_lea.vmem [#allocation4], %s191
    %v193 = vld [vmem:[%s192] sm:$0x1]
    %s194 = sadd.s32 %s28, 14
    %s195 = sld [smem:[#allocation3 + %s194]]
    %p196 = scmp.gt.s32.totalorder %s195, 0
    %s197 = scalar_select %p196, %s195, 0
    %p198 = scmp.lt.s32.totalorder %s197, 10
    %s199 = scalar_select %p198, %s197, 10
    %s200 = scalar_lea.vmem [#allocation4], %s199
    %v201 = vld [vmem:[%s200] sm:$0x1]
    %s202 = sadd.s32 %s28, 15
    %s203 = sld [smem:[#allocation3 + %s202]]
    %p204 = scmp.gt.s32.totalorder %s203, 0
    %s205 = scalar_select %p204, %s203, 0
    %p206 = scmp.lt.s32.totalorder %s205, 10
    %s207 = scalar_select %p206, %s205, 10
    %s208 = scalar_lea.vmem [#allocation4], %s207
    %v209 = vld [vmem:[%s208] sm:$0x1]
    %211 = vrot.lane.b32.xlu0 %v193, 32
    %v212 = vpop.permute.xlu0 %211
    %215 = vrot.lane.b32.xlu0 %v201, 64
    %v216 = vpop.permute.xlu0 %215
    %219 = vrot.lane.b32.xlu0 %v209, 96
    %v220 = vpop.permute.xlu0 %219
    %v222 = vsel %vm72, %v185, %v212
    %v223 = vsel %vm74, %v222, %v216
    %v224 = vsel %vm76, %v223, %v220
    %v225 = vmul.f32 %v224, 5.656854
    %226 = vst [vmem:[#allocation7 + $0x3] sm:$0x1] %v225
    %s227 = sadd.s32 %s28, 16
    %s228 = sld [smem:[#allocation3 + %s227]]
    %p229 = scmp.gt.s32.totalorder %s228, 0
    %s230 = scalar_select %p229, %s228, 0
    %p231 = scmp.lt.s32.totalorder %s230, 10
    %s232 = scalar_select %p231, %s230, 10
    %s233 = scalar_lea.vmem [#allocation4], %s232
    %v234 = vld [vmem:[%s233] sm:$0x1]
    %s235 = sadd.s32 %s28, 17
    %s236 = sld [smem:[#allocation3 + %s235]]
    %p237 = scmp.gt.s32.totalorder %s236, 0
    %s238 = scalar_select %p237, %s236, 0
    %p239 = scmp.lt.s32.totalorder %s238, 10
    %s240 = scalar_select %p239, %s238, 10
    %s241 = scalar_lea.vmem [#allocation4], %s240
    %v242 = vld [vmem:[%s241] sm:$0x1]
    %s243 = sadd.s32 %s28, 18
    %s244 = sld [smem:[#allocation3 + %s243]]
    %p245 = scmp.gt.s32.totalorder %s244, 0
    %s246 = scalar_select %p245, %s244, 0
    %p247 = scmp.lt.s32.totalorder %s246, 10
    %s248 = scalar_select %p247, %s246, 10
    %s249 = scalar_lea.vmem [#allocation4], %s248
    %v250 = vld [vmem:[%s249] sm:$0x1]
    %s251 = sadd.s32 %s28, 19
    %s252 = sld [smem:[#allocation3 + %s251]]
    %p253 = scmp.gt.s32.totalorder %s252, 0
    %s254 = scalar_select %p253, %s252, 0
    %p255 = scmp.lt.s32.totalorder %s254, 10
    %s256 = scalar_select %p255, %s254, 10
    %s257 = scalar_lea.vmem [#allocation4], %s256
    %v258 = vld [vmem:[%s257] sm:$0x1]
    %260 = vrot.lane.b32.xlu0 %v242, 32
    %v261 = vpop.permute.xlu0 %260
    %264 = vrot.lane.b32.xlu0 %v250, 64
    %v265 = vpop.permute.xlu0 %264
    %268 = vrot.lane.b32.xlu0 %v258, 96
    %v269 = vpop.permute.xlu0 %268
    %v271 = vsel %vm72, %v234, %v261
    %v272 = vsel %vm74, %v271, %v265
    %v273 = vsel %vm76, %v272, %v269
    %v274 = vmul.f32 %v273, 5.656854
    %275 = vst [vmem:[#allocation7 + $0x4] sm:$0x1] %v274
    %s276 = sadd.s32 %s28, 20
    %s277 = sld [smem:[#allocation3 + %s276]]
    %p278 = scmp.gt.s32.totalorder %s277, 0
    %s279 = scalar_select %p278, %s277, 0
    %p280 = scmp.lt.s32.totalorder %s279, 10
    %s281 = scalar_select %p280, %s279, 10
    %s282 = scalar_lea.vmem [#allocation4], %s281
    %v283 = vld [vmem:[%s282] sm:$0x1]
    %s284 = sadd.s32 %s28, 21
    %s285 = sld [smem:[#allocation3 + %s284]]
    %p286 = scmp.gt.s32.totalorder %s285, 0
    %s287 = scalar_select %p286, %s285, 0
    %p288 = scmp.lt.s32.totalorder %s287, 10
    %s289 = scalar_select %p288, %s287, 10
    %s290 = scalar_lea.vmem [#allocation4], %s289
    %v291 = vld [vmem:[%s290] sm:$0x1]
    %s292 = sadd.s32 %s28, 22
    %s293 = sld [smem:[#allocation3 + %s292]]
    %p294 = scmp.gt.s32.totalorder %s293, 0
    %s295 = scalar_select %p294, %s293, 0
    %p296 = scmp.lt.s32.totalorder %s295, 10
    %s297 = scalar_select %p296, %s295, 10
    %s298 = scalar_lea.vmem [#allocation4], %s297
    %v299 = vld [vmem:[%s298] sm:$0x1]
    %s300 = sadd.s32 %s28, 23
    %s301 = sld [smem:[#allocation3 + %s300]]
    %p302 = scmp.gt.s32.totalorder %s301, 0
    %s303 = scalar_select %p302, %s301, 0
    %p304 = scmp.lt.s32.totalorder %s303, 10
    %s305 = scalar_select %p304, %s303, 10
    %s306 = scalar_lea.vmem [#allocation4], %s305
    %v307 = vld [vmem:[%s306] sm:$0x1]
    %309 = vrot.lane.b32.xlu0 %v291, 32
    %v310 = vpop.permute.xlu0 %309
    %313 = vrot.lane.b32.xlu0 %v299, 64
    %v314 = vpop.permute.xlu0 %313
    %317 = vrot.lane.b32.xlu0 %v307, 96
    %v318 = vpop.permute.xlu0 %317
    %v320 = vsel %vm72, %v283, %v310
    %v321 = vsel %vm74, %v320, %v314
    %v322 = vsel %vm76, %v321, %v318
    %v323 = vmul.f32 %v322, 5.656854
    %324 = vst [vmem:[#allocation7 + $0x5] sm:$0x1] %v323
    %s325 = sadd.s32 %s28, 24
    %s326 = sld [smem:[#allocation3 + %s325]]
    %p327 = scmp.gt.s32.totalorder %s326, 0
    %s328 = scalar_select %p327, %s326, 0
    %p329 = scmp.lt.s32.totalorder %s328, 10
    %s330 = scalar_select %p329, %s328, 10
    %s331 = scalar_lea.vmem [#allocation4], %s330
    %v332 = vld [vmem:[%s331] sm:$0x1]
    %s333 = sadd.s32 %s28, 25
    %s334 = sld [smem:[#allocation3 + %s333]]
    %p335 = scmp.gt.s32.totalorder %s334, 0
    %s336 = scalar_select %p335, %s334, 0
    %p337 = scmp.lt.s32.totalorder %s336, 10
    %s338 = scalar_select %p337, %s336, 10
    %s339 = scalar_lea.vmem [#allocation4], %s338
    %v340 = vld [vmem:[%s339] sm:$0x1]
    %s341 = sadd.s32 %s28, 26
    %s342 = sld [smem:[#allocation3 + %s341]]
    %p343 = scmp.gt.s32.totalorder %s342, 0
    %s344 = scalar_select %p343, %s342, 0
    %p345 = scmp.lt.s32.totalorder %s344, 10
    %s346 = scalar_select %p345, %s344, 10
    %s347 = scalar_lea.vmem [#allocation4], %s346
    %v348 = vld [vmem:[%s347] sm:$0x1]
    %s349 = sadd.s32 %s28, 27
    %s350 = sld [smem:[#allocation3 + %s349]]
    %p351 = scmp.gt.s32.totalorder %s350, 0
    %s352 = scalar_select %p351, %s350, 0
    %p353 = scmp.lt.s32.totalorder %s352, 10
    %s354 = scalar_select %p353, %s352, 10
    %s355 = scalar_lea.vmem [#allocation4], %s354
    %v356 = vld [vmem:[%s355] sm:$0x1]
    %358 = vrot.lane.b32.xlu0 %v340, 32
    %v359 = vpop.permute.xlu0 %358
    %362 = vrot.lane.b32.xlu0 %v348, 64
    %v363 = vpop.permute.xlu0 %362
    %366 = vrot.lane.b32.xlu0 %v356, 96
    %v367 = vpop.permute.xlu0 %366
    %v369 = vsel %vm72, %v332, %v359
    %v370 = vsel %vm74, %v369, %v363
    %v371 = vsel %vm76, %v370, %v367
    %v372 = vmul.f32 %v371, 5.656854
    %373 = vst [vmem:[#allocation7 + $0x6] sm:$0x1] %v372
    %s374 = sadd.s32 %s28, 28
    %s375 = sld [smem:[#allocation3 + %s374]]
    %p376 = scmp.gt.s32.totalorder %s375, 0
    %s377 = scalar_select %p376, %s375, 0
    %p378 = scmp.lt.s32.totalorder %s377, 10
    %s379 = scalar_select %p378, %s377, 10
    %s380 = scalar_lea.vmem [#allocation4], %s379
    %v381 = vld [vmem:[%s380] sm:$0x1]
    %s382 = sadd.s32 %s28, 29
    %s383 = sld [smem:[#allocation3 + %s382]]
    %p384 = scmp.gt.s32.totalorder %s383, 0
    %s385 = scalar_select %p384, %s383, 0
    %p386 = scmp.lt.s32.totalorder %s385, 10
    %s387 = scalar_select %p386, %s385, 10
    %s388 = scalar_lea.vmem [#allocation4], %s387
    %v389 = vld [vmem:[%s388] sm:$0x1]
    %s390 = sadd.s32 %s28, 30
    %s391 = sld [smem:[#allocation3 + %s390]]
    %p392 = scmp.gt.s32.totalorder %s391, 0
    %s393 = scalar_select %p392, %s391, 0
    %p394 = scmp.lt.s32.totalorder %s393, 10
    %s395 = scalar_select %p394, %s393, 10
    %s396 = scalar_lea.vmem [#allocation4], %s395
    %v397 = vld [vmem:[%s396] sm:$0x1]
    %s398 = sadd.s32 %s28, 31
    %s399 = sld [smem:[#allocation3 + %s398]]
    %p400 = scmp.gt.s32.totalorder %s399, 0
    %s401 = scalar_select %p400, %s399, 0
    %p402 = scmp.lt.s32.totalorder %s401, 10
    %s403 = scalar_select %p402, %s401, 10
    %s404 = scalar_lea.vmem [#allocation4], %s403
    %v405 = vld [vmem:[%s404] sm:$0x1]
    %407 = vrot.lane.b32.xlu0 %v389, 32
    %v408 = vpop.permute.xlu0 %407
    %411 = vrot.lane.b32.xlu0 %v397, 64
    %v412 = vpop.permute.xlu0 %411
    %415 = vrot.lane.b32.xlu0 %v405, 96
    %v416 = vpop.permute.xlu0 %415
    %v418 = vsel %vm72, %v381, %v408
    %v419 = vsel %vm74, %v418, %v412
    %v420 = vsel %vm76, %v419, %v416
    %v421 = vmul.f32 %v420, 5.656854
    %422 = vst [vmem:[#allocation7 + $0x7] sm:$0x1] %v421
    // Predicated region
    $region10: #{tpu_custom_call.1} parent=1 // pred_check
      _
    $region11: #{tpu_custom_call.1} parent=1 // pred_check_branch
      %424 = sbr.rel (0) target = $region13
    $region12: #{tpu_custom_call.1} parent=1 // pred_region
      %s426 = ssub.s32 128, 128
      %427 = vsyncadd [#allocation6], %s426
      %s429 = sshll.u32 [#allocation7], 4
      %s430 = int_to_ptr.vmem [resolvable:$true] %s429
      %432 = dma.vmem_to_hbm [thread:$0]  %s430, 128, %s2, [#allocation6]
    $region13: #{tpu_custom_call.1} parent=1 // pred_fallthru
      _
    // Predicated region
    $region14: #{tpu_custom_call.1} parent=1 // pred_check
      _
    $region15: #{tpu_custom_call.1} parent=1 // pred_check_branch
      %434 = sbr.rel (0) target = $region17
    $region16: #{tpu_custom_call.1} parent=1 // pred_region
      %435 = dma.done [#allocation6], 128
    $region17: #{tpu_custom_call.1} parent=1 // pred_fallthru
      _
    %436 = vsyncpa [#allocation5], 1
    %437 = vsyncpa [#allocation6], 1

</llo_original>
